<compile_context>
chip_gen: v7x
topology: tpu7x:2x2x1
jax: 0.10.0
libtpu: 0.0.40
codegen_flags: <defaults>
</compile_context>

<pallas_src>
import jax
import jax.numpy as jnp
from jax.experimental import pallas as pl
from jax.experimental.pallas import tpu as pltpu

NEG_SLOPE = 0.01  # torch.nn.LeakyReLU default


def _leaky_relu(z):
    return jnp.where(z > 0, z, NEG_SLOPE * z)


def _round_up(n, m):
    return ((n + m - 1) // m) * m


def mlp_kernel(x_ref, *refs):
    """Fused forward: refs = (w1, b1, ..., w5, b5, out)."""
    o_ref = refs[-1]
    param_refs = refs[:-1]
    n_layers = len(param_refs) // 2

    h = x_ref[...]  # f32 tile straight from HBM
    for layer in range(n_layers):
        w_ref = param_refs[2 * layer]
        b_ref = param_refs[2 * layer + 1]
        # bf16 operands on the MXU, f32 accumulation; bias add in f32.
        z = jnp.dot(h.astype(w_ref.dtype), w_ref[...],
                    preferred_element_type=jnp.float32)
        z = z + b_ref[...].astype(jnp.float32)
        h = _leaky_relu(z) if layer < n_layers - 1 else z
    o_ref[...] = h.astype(o_ref.dtype)


def mlp_forward(x, params, *, block_m=1024, compute_dtype=jnp.bfloat16):
    """x: f32 [B, input_size].  params: list of (W[in, out], b[1, out]) in f32.

    Returns f32 [B, output_size].  block_m is the max batch tile per grid
    step (sweep 512/1024/2048 per chip; intermediates are tiny either way).
    """
    B, in_features = x.shape
    out_size = params[-1][0].shape[1]

    # ---- batch tiling: multiple of 8 rows (f32 input); >=2 grid steps when
    # the batch is big enough so v7x's two TensorCores both get work. ----
    bm = min(block_m, _round_up(B, 8))
    if B > 16:
        bm = min(bm, _round_up(pl.cdiv(B, 2), 8))
    bm = max(bm, 8)
    n_steps = pl.cdiv(B, bm)  # partial trailing block handled by Pallas

    # ---- parameters: bf16 weights, f32 biases (tiny, VMEM-resident) ----
    flat_params = []
    for w, b in params:
        flat_params.append(w.astype(compute_dtype))
        flat_params.append(b.astype(jnp.float32).reshape(1, -1))

    # ---- specs ----
    x_spec = pl.BlockSpec((bm, in_features), lambda i: (i, 0))
    # Constant across grid steps -> whole-array VMEM residents (no pipelining,
    # no double-buffered copies of the weights).
    param_specs = [pl.BlockSpec(memory_space=pltpu.MemorySpace.VMEM)
                   for _ in flat_params]
    out_spec = pl.BlockSpec((bm, out_size), lambda i: (i, 0))

    # ---- advisory cost estimate for the XLA scheduler ----
    dims = [in_features] + [w.shape[1] for w, _ in params]
    flops = 2 * B * sum(dims[i] * dims[i + 1] for i in range(len(dims) - 1))
    bytes_accessed = (x.size * x.dtype.itemsize
                      + B * out_size * 4
                      + sum(int(p.size) * p.dtype.itemsize for p in flat_params))

    out = pl.pallas_call(
        mlp_kernel,
        out_shape=jax.ShapeDtypeStruct((B, out_size), jnp.float32),
        grid_spec=pltpu.PrefetchScalarGridSpec(
            num_scalar_prefetch=0,
            grid=(n_steps,),
            in_specs=[x_spec] + param_specs,
            out_specs=out_spec,
        ),
        compiler_params=pltpu.CompilerParams(
            dimension_semantics=("parallel",),
            vmem_limit_bytes=32 * 1024 * 1024,
        ),
        cost_estimate=pl.CostEstimate(
            flops=flops, transcendentals=0, bytes_accessed=bytes_accessed),
    )(x, *flat_params)

    return out


def init_mlp_params(key, input_size, output_size):
    """Deterministic init mirroring the nn.Linear shapes of the module."""
    dims = [input_size, 128, 64, 32, 32, output_size]
    params = []
    for i in range(len(dims) - 1):
        key, kw, kb = jax.random.split(key, 3)
        fan_in, fan_out = dims[i], dims[i + 1]
        bound = 1.0 / jnp.sqrt(jnp.float32(fan_in))
        # Stored already transposed: [in, out] (PyTorch stores [out, in]).
        w = jax.random.uniform(kw, (fan_in, fan_out), jnp.float32, -bound, bound)
        b = jax.random.uniform(kb, (1, fan_out), jnp.float32, -bound, bound)
        params.append((w, b))
    return params


def mlp_reference(x, params, compute_dtype=jnp.bfloat16):
    """Pure-JAX reference mirroring the kernel's mixed-precision casts."""
    h = x
    for i, (w, b) in enumerate(params):
        z = jnp.dot(h.astype(compute_dtype), w.astype(compute_dtype),
                    preferred_element_type=jnp.float32)
        z = z + b.astype(jnp.float32)
        h = jnp.where(z > 0, z, NEG_SLOPE * z) if i < len(params) - 1 else z
    return h


if __name__ == "__main__":
    key = jax.random.PRNGKey(0)
    input_size, output_size = 32, 16
    params = init_mlp_params(key, input_size, output_size)

    # Case 1: tiny batch, single grid step.
    key, kx = jax.random.split(key)
    x = jax.random.normal(kx, (8, input_size), jnp.float32)
    out = jax.block_until_ready(mlp_forward(x, params))
    ref = mlp_reference(x, params)
    assert out.shape == (8, output_size) and out.dtype == jnp.float32
    err = float(jnp.max(jnp.abs(out - ref)))
    assert jnp.allclose(out, ref, atol=1e-2, rtol=1e-2), f"max abs err {err}"

    # Case 2: non-divisible batch -> 2 grid steps with a partial trailing block.
    key, kx = jax.random.split(key)
    x2 = jax.random.normal(kx, (20, input_size), jnp.float32)
    out2 = jax.block_until_ready(mlp_forward(x2, params))
    ref2 = mlp_reference(x2, params)
    assert out2.shape == (20, output_size) and out2.dtype == jnp.float32
    err2 = float(jnp.max(jnp.abs(out2 - ref2)))
    assert jnp.allclose(out2, ref2, atol=1e-2, rtol=1e-2), f"max abs err {err2}"

    print("KERNEL_OK")
</pallas_src>

<mosaic_0001>
module attributes {stable_mosaic.version = 11 : i64} {
  func.func @mlp_kernel(%arg0: i32, %arg1: memref<8x32xf32, #tpu.memory_space<vmem>>, %arg2: memref<32x128xbf16, #tpu.memory_space<vmem>>, %arg3: memref<1x128xf32, #tpu.memory_space<vmem>>, %arg4: memref<128x64xbf16, #tpu.memory_space<vmem>>, %arg5: memref<1x64xf32, #tpu.memory_space<vmem>>, %arg6: memref<64x32xbf16, #tpu.memory_space<vmem>>, %arg7: memref<1x32xf32, #tpu.memory_space<vmem>>, %arg8: memref<32x32xbf16, #tpu.memory_space<vmem>>, %arg9: memref<1x32xf32, #tpu.memory_space<vmem>>, %arg10: memref<32x16xbf16, #tpu.memory_space<vmem>>, %arg11: memref<1x16xf32, #tpu.memory_space<vmem>>, %arg12: memref<8x16xf32, #tpu.memory_space<vmem>>) attributes {dimension_semantics = [#tpu.dimension_semantics<parallel>], iteration_bounds = array<i64: 1>, scalar_prefetch = 0 : i64, scratch_operands = 0 : i64, tpu.core_type = #tpu.core_type<tc>, window_params = [{transform_indices = @transform_0, window_bounds = array<i64: 8, 32>}, {pipeline_mode = #tpu.pipeline_mode<synchronous>, transform_indices = @transform_1, window_bounds = array<i64: 32, 128>}, {pipeline_mode = #tpu.pipeline_mode<synchronous>, transform_indices = @transform_2, window_bounds = array<i64: 1, 128>}, {pipeline_mode = #tpu.pipeline_mode<synchronous>, transform_indices = @transform_3, window_bounds = array<i64: 128, 64>}, {pipeline_mode = #tpu.pipeline_mode<synchronous>, transform_indices = @transform_4, window_bounds = array<i64: 1, 64>}, {pipeline_mode = #tpu.pipeline_mode<synchronous>, transform_indices = @transform_5, window_bounds = array<i64: 64, 32>}, {pipeline_mode = #tpu.pipeline_mode<synchronous>, transform_indices = @transform_6, window_bounds = array<i64: 1, 32>}, {pipeline_mode = #tpu.pipeline_mode<synchronous>, transform_indices = @transform_7, window_bounds = array<i64: 32, 32>}, {pipeline_mode = #tpu.pipeline_mode<synchronous>, transform_indices = @transform_8, window_bounds = array<i64: 1, 32>}, {pipeline_mode = #tpu.pipeline_mode<synchronous>, transform_indices = @transform_9, window_bounds = array<i64: 32, 16>}, {pipeline_mode = #tpu.pipeline_mode<synchronous>, transform_indices = @transform_10, window_bounds = array<i64: 1, 16>}, {transform_indices = @transform_11, window_bounds = array<i64: 8, 16>}]} {
    %c0 = arith.constant 0 : index
    %c0_0 = arith.constant 0 : index
    %0 = vector.load %arg1[%c0, %c0_0] : memref<8x32xf32, #tpu.memory_space<vmem>>, vector<8x32xf32>
    %1 = arith.truncf %0 : vector<8x32xf32> to vector<8x32xbf16>
    %c0_1 = arith.constant 0 : index
    %c0_2 = arith.constant 0 : index
    %2 = vector.load %arg2[%c0_1, %c0_2] : memref<32x128xbf16, #tpu.memory_space<vmem>>, vector<32x128xbf16>
    %cst = arith.constant dense<0.000000e+00> : vector<8x128xf32>
    %3 = tpu.matmul %1, %2, %cst {dimension_numbers = #tpu.dot_dimension_numbers<[1], [0], [0], [1], [0, 0, 1, 1], [], []>} : vector<8x32xbf16>, vector<32x128xbf16>, vector<8x128xf32> -> vector<8x128xf32>
    %c0_3 = arith.constant 0 : index
    %c0_4 = arith.constant 0 : index
    %4 = vector.load %arg3[%c0_3, %c0_4] : memref<1x128xf32, #tpu.memory_space<vmem>>, vector<1x128xf32>
    %5 = vector.broadcast %4 : vector<1x128xf32> to vector<8x128xf32>
    %6 = arith.addf %3, %5 : vector<8x128xf32>
    %cst_5 = arith.constant 0.000000e+00 : f32
    %7 = vector.broadcast %cst_5 : f32 to vector<8x128xf32>
    %8 = arith.cmpf ogt, %6, %7 : vector<8x128xf32>
    %cst_6 = arith.constant 0.00999999977 : f32
    %9 = vector.broadcast %cst_6 : f32 to vector<8x128xf32>
    %10 = arith.mulf %9, %6 : vector<8x128xf32>
    %11 = arith.select %8, %6, %10 : vector<8x128xi1>, vector<8x128xf32>
    %12 = arith.truncf %11 : vector<8x128xf32> to vector<8x128xbf16>
    %c0_7 = arith.constant 0 : index
    %c0_8 = arith.constant 0 : index
    %13 = vector.load %arg4[%c0_7, %c0_8] : memref<128x64xbf16, #tpu.memory_space<vmem>>, vector<128x64xbf16>
    %cst_9 = arith.constant dense<0.000000e+00> : vector<8x64xf32>
    %14 = tpu.matmul %12, %13, %cst_9 {dimension_numbers = #tpu.dot_dimension_numbers<[1], [0], [0], [1], [0, 0, 1, 1], [], []>} : vector<8x128xbf16>, vector<128x64xbf16>, vector<8x64xf32> -> vector<8x64xf32>
    %c0_10 = arith.constant 0 : index
    %c0_11 = arith.constant 0 : index
    %15 = vector.load %arg5[%c0_10, %c0_11] : memref<1x64xf32, #tpu.memory_space<vmem>>, vector<1x64xf32>
    %16 = vector.broadcast %15 : vector<1x64xf32> to vector<8x64xf32>
    %17 = arith.addf %14, %16 : vector<8x64xf32>
    %cst_12 = arith.constant 0.000000e+00 : f32
    %18 = vector.broadcast %cst_12 : f32 to vector<8x64xf32>
    %19 = arith.cmpf ogt, %17, %18 : vector<8x64xf32>
    %cst_13 = arith.constant 0.00999999977 : f32
    %20 = vector.broadcast %cst_13 : f32 to vector<8x64xf32>
    %21 = arith.mulf %20, %17 : vector<8x64xf32>
    %22 = arith.select %19, %17, %21 : vector<8x64xi1>, vector<8x64xf32>
    %23 = arith.truncf %22 : vector<8x64xf32> to vector<8x64xbf16>
    %c0_14 = arith.constant 0 : index
    %c0_15 = arith.constant 0 : index
    %24 = vector.load %arg6[%c0_14, %c0_15] : memref<64x32xbf16, #tpu.memory_space<vmem>>, vector<64x32xbf16>
    %cst_16 = arith.constant dense<0.000000e+00> : vector<8x32xf32>
    %25 = tpu.matmul %23, %24, %cst_16 {dimension_numbers = #tpu.dot_dimension_numbers<[1], [0], [0], [1], [0, 0, 1, 1], [], []>} : vector<8x64xbf16>, vector<64x32xbf16>, vector<8x32xf32> -> vector<8x32xf32>
    %c0_17 = arith.constant 0 : index
    %c0_18 = arith.constant 0 : index
    %26 = vector.load %arg7[%c0_17, %c0_18] : memref<1x32xf32, #tpu.memory_space<vmem>>, vector<1x32xf32>
    %27 = vector.broadcast %26 : vector<1x32xf32> to vector<8x32xf32>
    %28 = arith.addf %25, %27 : vector<8x32xf32>
    %cst_19 = arith.constant 0.000000e+00 : f32
    %29 = vector.broadcast %cst_19 : f32 to vector<8x32xf32>
    %30 = arith.cmpf ogt, %28, %29 : vector<8x32xf32>
    %cst_20 = arith.constant 0.00999999977 : f32
    %31 = vector.broadcast %cst_20 : f32 to vector<8x32xf32>
    %32 = arith.mulf %31, %28 : vector<8x32xf32>
    %33 = arith.select %30, %28, %32 : vector<8x32xi1>, vector<8x32xf32>
    %34 = arith.truncf %33 : vector<8x32xf32> to vector<8x32xbf16>
    %c0_21 = arith.constant 0 : index
    %c0_22 = arith.constant 0 : index
    %35 = vector.load %arg8[%c0_21, %c0_22] : memref<32x32xbf16, #tpu.memory_space<vmem>>, vector<32x32xbf16>
    %cst_23 = arith.constant dense<0.000000e+00> : vector<8x32xf32>
    %36 = tpu.matmul %34, %35, %cst_23 {dimension_numbers = #tpu.dot_dimension_numbers<[1], [0], [0], [1], [0, 0, 1, 1], [], []>} : vector<8x32xbf16>, vector<32x32xbf16>, vector<8x32xf32> -> vector<8x32xf32>
    %c0_24 = arith.constant 0 : index
    %c0_25 = arith.constant 0 : index
    %37 = vector.load %arg9[%c0_24, %c0_25] : memref<1x32xf32, #tpu.memory_space<vmem>>, vector<1x32xf32>
    %38 = vector.broadcast %37 : vector<1x32xf32> to vector<8x32xf32>
    %39 = arith.addf %36, %38 : vector<8x32xf32>
    %cst_26 = arith.constant 0.000000e+00 : f32
    %40 = vector.broadcast %cst_26 : f32 to vector<8x32xf32>
    %41 = arith.cmpf ogt, %39, %40 : vector<8x32xf32>
    %cst_27 = arith.constant 0.00999999977 : f32
    %42 = vector.broadcast %cst_27 : f32 to vector<8x32xf32>
    %43 = arith.mulf %42, %39 : vector<8x32xf32>
    %44 = arith.select %41, %39, %43 : vector<8x32xi1>, vector<8x32xf32>
    %45 = arith.truncf %44 : vector<8x32xf32> to vector<8x32xbf16>
    %c0_28 = arith.constant 0 : index
    %c0_29 = arith.constant 0 : index
    %46 = vector.load %arg10[%c0_28, %c0_29] : memref<32x16xbf16, #tpu.memory_space<vmem>>, vector<32x16xbf16>
    %cst_30 = arith.constant dense<0.000000e+00> : vector<8x16xf32>
    %47 = tpu.matmul %45, %46, %cst_30 {dimension_numbers = #tpu.dot_dimension_numbers<[1], [0], [0], [1], [0, 0, 1, 1], [], []>} : vector<8x32xbf16>, vector<32x16xbf16>, vector<8x16xf32> -> vector<8x16xf32>
    %c0_31 = arith.constant 0 : index
    %c0_32 = arith.constant 0 : index
    %48 = vector.load %arg11[%c0_31, %c0_32] : memref<1x16xf32, #tpu.memory_space<vmem>>, vector<1x16xf32>
    %49 = vector.broadcast %48 : vector<1x16xf32> to vector<8x16xf32>
    %50 = arith.addf %47, %49 : vector<8x16xf32>
    %c0_33 = arith.constant 0 : index
    %c0_34 = arith.constant 0 : index
    %51 = vector.load %arg12[%c0_33, %c0_34] : memref<8x16xf32, #tpu.memory_space<vmem>>, vector<8x16xf32>
    tpu.vector_store %arg12[%c0_33, %c0_34], %50 {strides = array<i32>} : memref<8x16xf32, #tpu.memory_space<vmem>>, vector<8x16xf32>,
    return
  }
  func.func @transform_0(%arg0: i32) -> (i32, i32) {
    %c0_i32 = arith.constant 0 : i32
    %c0_i32_0 = arith.constant 0 : i32
    return %arg0, %c0_i32 : i32, i32
  }
  func.func @transform_1(%arg0: i32) -> (i32, i32) {
    %c0_i32 = arith.constant 0 : i32
    %c0_i32_0 = arith.constant 0 : i32
    %c0_i32_1 = arith.constant 0 : i32
    return %c0_i32, %c0_i32_0 : i32, i32
  }
  func.func @transform_2(%arg0: i32) -> (i32, i32) {
    %c0_i32 = arith.constant 0 : i32
    %c0_i32_0 = arith.constant 0 : i32
    %c0_i32_1 = arith.constant 0 : i32
    return %c0_i32, %c0_i32_0 : i32, i32
  }
  func.func @transform_3(%arg0: i32) -> (i32, i32) {
    %c0_i32 = arith.constant 0 : i32
    %c0_i32_0 = arith.constant 0 : i32
    %c0_i32_1 = arith.constant 0 : i32
    return %c0_i32, %c0_i32_0 : i32, i32
  }
  func.func @transform_4(%arg0: i32) -> (i32, i32) {
    %c0_i32 = arith.constant 0 : i32
    %c0_i32_0 = arith.constant 0 : i32
    %c0_i32_1 = arith.constant 0 : i32
    return %c0_i32, %c0_i32_0 : i32, i32
  }
  func.func @transform_5(%arg0: i32) -> (i32, i32) {
    %c0_i32 = arith.constant 0 : i32
    %c0_i32_0 = arith.constant 0 : i32
    %c0_i32_1 = arith.constant 0 : i32
    return %c0_i32, %c0_i32_0 : i32, i32
  }
  func.func @transform_6(%arg0: i32) -> (i32, i32) {
    %c0_i32 = arith.constant 0 : i32
    %c0_i32_0 = arith.constant 0 : i32
    %c0_i32_1 = arith.constant 0 : i32
    return %c0_i32, %c0_i32_0 : i32, i32
  }
  func.func @transform_7(%arg0: i32) -> (i32, i32) {
    %c0_i32 = arith.constant 0 : i32
    %c0_i32_0 = arith.constant 0 : i32
    %c0_i32_1 = arith.constant 0 : i32
    return %c0_i32, %c0_i32_0 : i32, i32
  }
  func.func @transform_8(%arg0: i32) -> (i32, i32) {
    %c0_i32 = arith.constant 0 : i32
    %c0_i32_0 = arith.constant 0 : i32
    %c0_i32_1 = arith.constant 0 : i32
    return %c0_i32, %c0_i32_0 : i32, i32
  }
  func.func @transform_9(%arg0: i32) -> (i32, i32) {
    %c0_i32 = arith.constant 0 : i32
    %c0_i32_0 = arith.constant 0 : i32
    %c0_i32_1 = arith.constant 0 : i32
    return %c0_i32, %c0_i32_0 : i32, i32
  }
  func.func @transform_10(%arg0: i32) -> (i32, i32) {
    %c0_i32 = arith.constant 0 : i32
    %c0_i32_0 = arith.constant 0 : i32
    %c0_i32_1 = arith.constant 0 : i32
    return %c0_i32, %c0_i32_0 : i32, i32
  }
  func.func @transform_11(%arg0: i32) -> (i32, i32) {
    %c0_i32 = arith.constant 0 : i32
    %c0_i32_0 = arith.constant 0 : i32
    return %arg0, %c0_i32 : i32, i32
  }
}

</mosaic_0001>

<llo_original>
// kernel: tpu_custom_call.1
$region0: #{tpu_custom_call.1}
  #allocation0 [shape = 'u32[]', space=smem, size = 0x4, offset = 0x4, fixed_abs, tag = 'smem constant byte address 0x4 - core index']
  #allocation1 [shape = 'u32[144,128]{1,0:T(1,128)}', space=vmem, size = 0x12000, scoped, tag = 'internal scratch']
  %s0 = inlined_call_operand.vmem [shape: f32[8,32], index: 0, kind: input, shape index: {}]
  %s1 = inlined_call_operand.vmem [shape: bf16[32,128], index: 1, kind: input, shape index: {}]
  %s2 = inlined_call_operand.vmem [shape: f32[1,128], index: 2, kind: input, shape index: {}]
  %s3 = inlined_call_operand.vmem [shape: bf16[128,64], index: 3, kind: input, shape index: {}]
  %s4 = inlined_call_operand.vmem [shape: f32[1,64], index: 4, kind: input, shape index: {}]
  %s5 = inlined_call_operand.vmem [shape: bf16[64,32], index: 5, kind: input, shape index: {}]
  %s6 = inlined_call_operand.vmem [shape: f32[1,32], index: 6, kind: input, shape index: {}]
  %s7 = inlined_call_operand.vmem [shape: bf16[32,32], index: 7, kind: input, shape index: {}]
  %s8 = inlined_call_operand.vmem [shape: f32[1,32], index: 8, kind: input, shape index: {}]
  %s9 = inlined_call_operand.vmem [shape: bf16[32,16], index: 9, kind: input, shape index: {}]
  %s10 = inlined_call_operand.vmem [shape: f32[1,16], index: 10, kind: input, shape index: {}]
  %s11 = inlined_call_operand.hbm [shape: f32[8,16], index: 11, kind: output, shape index: {}]
  %s12 = sld [smem:[#allocation0]]
  $region54: #{tpu_custom_call.1} parent=0
    _
  %s14 = ssub.s32 1, %s12
  %s15 = scalar_select 0, %s14, %s12
  $region1: #{tpu_custom_call.1} parent=0
    #allocation2 [shape = 'u8[4096]{0}', space=vmem, size = 0x1000, scoped, tag = 'output window, operand 0, single buffered']
    #allocation3 [shape = 's32[1]{0}', space=sflag, size = 0x4, scoped, tag = 'scoped memory for tpu_custom_call.1']
    %16 = vsyncpa [#allocation3], 0
    // Predicated region
    $region2: #{tpu_custom_call.1} parent=1 // pred_check
      _
    $region3: #{tpu_custom_call.1} parent=1 // pred_check_branch
      %18 = sbr.rel (0) target = $region5
    $region4: #{tpu_custom_call.1} parent=1 // pred_region
      _
    $region5: #{tpu_custom_call.1} parent=1 // pred_fallthru
      _
    // Predicated region
    $region6: #{tpu_custom_call.1} parent=1 // pred_check
      _
    $region7: #{tpu_custom_call.1} parent=1 // pred_check_branch
      %20 = sbr.rel (0) target = $region9
    $region8: #{tpu_custom_call.1} parent=1 // pred_region
      _
    $region9: #{tpu_custom_call.1} parent=1 // pred_fallthru
      _
    // Predicated region
    $region10: #{tpu_custom_call.1} parent=1 // pred_check
      _
    $region11: #{tpu_custom_call.1} parent=1 // pred_check_branch
      %22 = sbr.rel (0) target = $region13
    $region12: #{tpu_custom_call.1} parent=1 // pred_region
      _
    $region13: #{tpu_custom_call.1} parent=1 // pred_fallthru
      _
    // Predicated region
    $region14: #{tpu_custom_call.1} parent=1 // pred_check
      _
    $region15: #{tpu_custom_call.1} parent=1 // pred_check_branch
      %24 = sbr.rel (0) target = $region17
    $region16: #{tpu_custom_call.1} parent=1 // pred_region
      _
    $region17: #{tpu_custom_call.1} parent=1 // pred_fallthru
      _
    // Predicated region
    $region18: #{tpu_custom_call.1} parent=1 // pred_check
      _
    $region19: #{tpu_custom_call.1} parent=1 // pred_check_branch
      %26 = sbr.rel (0) target = $region21
    $region20: #{tpu_custom_call.1} parent=1 // pred_region
      _
    $region21: #{tpu_custom_call.1} parent=1 // pred_fallthru
      _
    // Predicated region
    $region22: #{tpu_custom_call.1} parent=1 // pred_check
      _
    $region23: #{tpu_custom_call.1} parent=1 // pred_check_branch
      %28 = sbr.rel (0) target = $region25
    $region24: #{tpu_custom_call.1} parent=1 // pred_region
      _
    $region25: #{tpu_custom_call.1} parent=1 // pred_fallthru
      _
    // Predicated region
    $region26: #{tpu_custom_call.1} parent=1 // pred_check
      _
    $region27: #{tpu_custom_call.1} parent=1 // pred_check_branch
      %30 = sbr.rel (0) target = $region29
    $region28: #{tpu_custom_call.1} parent=1 // pred_region
      _
    $region29: #{tpu_custom_call.1} parent=1 // pred_fallthru
      _
    // Predicated region
    $region30: #{tpu_custom_call.1} parent=1 // pred_check
      _
    $region31: #{tpu_custom_call.1} parent=1 // pred_check_branch
      %32 = sbr.rel (0) target = $region33
    $region32: #{tpu_custom_call.1} parent=1 // pred_region
      _
    $region33: #{tpu_custom_call.1} parent=1 // pred_fallthru
      _
    // Predicated region
    $region34: #{tpu_custom_call.1} parent=1 // pred_check
      _
    $region35: #{tpu_custom_call.1} parent=1 // pred_check_branch
      %34 = sbr.rel (0) target = $region37
    $region36: #{tpu_custom_call.1} parent=1 // pred_region
      _
    $region37: #{tpu_custom_call.1} parent=1 // pred_fallthru
      _
    // Predicated region
    $region38: #{tpu_custom_call.1} parent=1 // pred_check
      _
    $region39: #{tpu_custom_call.1} parent=1 // pred_check_branch
      %36 = sbr.rel (0) target = $region41
    $region40: #{tpu_custom_call.1} parent=1 // pred_region
      _
    $region41: #{tpu_custom_call.1} parent=1 // pred_fallthru
      _
    // Predicated region
    $region42: #{tpu_custom_call.1} parent=1 // pred_check
      _
    $region43: #{tpu_custom_call.1} parent=1 // pred_check_branch
      %38 = sbr.rel (0) target = $region45
    $region44: #{tpu_custom_call.1} parent=1 // pred_region
      _
    $region45: #{tpu_custom_call.1} parent=1 // pred_fallthru
      _
    %v40 = vld [vmem:[%s0] sm:$0xff]
    %v41 = vpack.c.bf16 %v40, %v40
    %v42 = vld [vmem:[%s1] sm:$0xf]
    %v43 = vld [vmem:[%s1 + $0x4] sm:$0xf]
    %v44 = vld [vmem:[%s1 + $0x8] sm:$0xf]
    %v45 = vld [vmem:[%s1 + $0xc] sm:$0xf]
    %v46 = vld [vmem:[%s2] sm:$0x1]
    %v48 = vlaneseq
    %v49 = vshrl.u32 %v48, 7
    %v50 = vsub.s32 0, %v49
    %v51 = vrot.slane %v46, %v50
    %v57 = vunpack.c.l.b16 %v42
    %v58 = vunpack.c.l.b16 %v43
    %v59 = vunpack.c.l.b16 %v44
    %v60 = vunpack.c.l.b16 %v45
    %v61 = vpack.c.b16 %v58, %v57
    %v62 = vpack.c.b16 %v60, %v59
    %vm65 = vcmask 261120
    %v67 = vsel %vm65, %v41, 0
    %69 = vmatprep.subr.bf16.mxu0 0
    %70 = vmatpush1.bf16.msra.mxu0 %v61
    %71 = vmatprep.subr.bf16.mxu0 0
    %72 = vmatpush1.bf16.msra.mxu0 %v62
    %73 = vmatprep.subr.bf16.mxu0 0
    %74 = vmatpush1.bf16.msra.mxu0 0
    %75 = vmatprep.subr.bf16.mxu0 0
    %76 = vmatpush1.bf16.msra.mxu0 0
    %77 = vmatprep.subr.bf16.mxu0 0
    %78 = vmatpush1.bf16.msra.mxu0 0
    %79 = vmatprep.subr.bf16.mxu0 0
    %80 = vmatpush1.bf16.msra.mxu0 0
    %81 = vmatprep.subr.bf16.mxu0 0
    %82 = vmatpush1.bf16.msra.mxu0 0
    %83 = vmatprep.subr.bf16.mxu0 0
    %84 = vmatpush1.bf16.msra.mxu0 0
    %85 = vmatprep.subr.bf16.mxu0 0
    %86 = vmatpush1.bf16.msra.mxu0 0
    %87 = vmatprep.subr.bf16.mxu0 0
    %88 = vmatpush1.bf16.msra.mxu0 0
    %89 = vmatprep.subr.bf16.mxu0 0
    %90 = vmatpush1.bf16.msra.mxu0 0
    %91 = vmatprep.subr.bf16.mxu0 0
    %92 = vmatpush1.bf16.msra.mxu0 0
    %93 = vmatprep.subr.bf16.mxu0 0
    %94 = vmatpush1.bf16.msra.mxu0 0
    %95 = vmatprep.subr.bf16.mxu0 0
    %96 = vmatpush1.bf16.msra.mxu0 0
    %97 = vmatprep.subr.bf16.mxu0 0
    %98 = vmatpush1.bf16.msra.mxu0 0
    %99 = vmatprep.subr.bf16.mxu0 0
    %100 = vmatpush1.bf16.msra.mxu0 0
    %101 = vmatprep.mubr.bf16.mxu0 0
    %102 = vmatmul.mubr.bf16.gmra.mrb[0].mxu0 %v67
    %v103 = vpop.f32.mrb[0].mxu0
    %v104 = vadd.f32 %v51, %v103
    %v105 = vpop.f32.mrb[0].mxu0
    %v106 = vpop.f32.mrb[0].mxu0
    %v107 = vpop.f32.mrb[0].mxu0
    %108 = vdwg.mxu0
    %vm109 = vcmp.gt.f32.partialorder %v104, 0.0
    %v110 = vmul.f32 %v104, 0.01
    %v111 = vsel %vm109, %v104, %v110
    %v112 = vpack.c.bf16 %v111, %v111
    %v113 = vld [vmem:[%s3] sm:$0xf]
    %v114 = vld [vmem:[%s3 + $0x4] sm:$0xf]
    %v115 = vld [vmem:[%s3 + $0x8] sm:$0xf]
    %v116 = vld [vmem:[%s3 + $0xc] sm:$0xf]
    %v117 = vld [vmem:[%s3 + $0x10] sm:$0xf]
    %v118 = vld [vmem:[%s3 + $0x14] sm:$0xf]
    %v119 = vld [vmem:[%s3 + $0x18] sm:$0xf]
    %v120 = vld [vmem:[%s3 + $0x1c] sm:$0xf]
    %v121 = vld [vmem:[%s3 + $0x20] sm:$0xf]
    %v122 = vld [vmem:[%s3 + $0x24] sm:$0xf]
    %v123 = vld [vmem:[%s3 + $0x28] sm:$0xf]
    %v124 = vld [vmem:[%s3 + $0x2c] sm:$0xf]
    %v125 = vld [vmem:[%s3 + $0x30] sm:$0xf]
    %v126 = vld [vmem:[%s3 + $0x34] sm:$0xf]
    %v127 = vld [vmem:[%s3 + $0x38] sm:$0xf]
    %v128 = vld [vmem:[%s3 + $0x3c] sm:$0xf]
    %v129 = vld [vmem:[%s4] sm:$0x1]
    %v131 = vlaneseq
    %v132 = vshrl.u32 %v131, 7
    %v133 = vsub.s32 0, %v132
    %v134 = vrot.slane %v129, %v133
    %v152 = vunpack.c.l.b16 %v113
    %v153 = vunpack.c.l.b16 %v114
    %v154 = vunpack.c.l.b16 %v115
    %v155 = vunpack.c.l.b16 %v116
    %v156 = vunpack.c.l.b16 %v117
    %v157 = vunpack.c.l.b16 %v118
    %v158 = vunpack.c.l.b16 %v119
    %v159 = vunpack.c.l.b16 %v120
    %v160 = vunpack.c.l.b16 %v121
    %v161 = vunpack.c.l.b16 %v122
    %v162 = vunpack.c.l.b16 %v123
    %v163 = vunpack.c.l.b16 %v124
    %v164 = vunpack.c.l.b16 %v125
    %v165 = vunpack.c.l.b16 %v126
    %v166 = vunpack.c.l.b16 %v127
    %v167 = vunpack.c.l.b16 %v128
    %v168 = vpack.c.b16 %v153, %v152
    %v169 = vpack.c.b16 %v155, %v154
    %v170 = vpack.c.b16 %v157, %v156
    %v171 = vpack.c.b16 %v159, %v158
    %v172 = vpack.c.b16 %v161, %v160
    %v173 = vpack.c.b16 %v163, %v162
    %v174 = vpack.c.b16 %v165, %v164
    %v175 = vpack.c.b16 %v167, %v166
    %184 = vmatprep.subr.bf16.mxu0 0
    %185 = vmatpush1.bf16.msra.mxu0 %v168
    %186 = vmatprep.subr.bf16.mxu0 0
    %187 = vmatpush1.bf16.msra.mxu0 %v169
    %188 = vmatprep.subr.bf16.mxu0 0
    %189 = vmatpush1.bf16.msra.mxu0 %v170
    %190 = vmatprep.subr.bf16.mxu0 0
    %191 = vmatpush1.bf16.msra.mxu0 %v171
    %192 = vmatprep.subr.bf16.mxu0 0
    %193 = vmatpush1.bf16.msra.mxu0 %v172
    %194 = vmatprep.subr.bf16.mxu0 0
    %195 = vmatpush1.bf16.msra.mxu0 %v173
    %196 = vmatprep.subr.bf16.mxu0 0
    %197 = vmatpush1.bf16.msra.mxu0 %v174
    %198 = vmatprep.subr.bf16.mxu0 0
    %199 = vmatpush1.bf16.msra.mxu0 %v175
    %200 = vmatprep.subr.bf16.mxu0 0
    %201 = vmatpush1.bf16.msra.mxu0 0
    %202 = vmatprep.subr.bf16.mxu0 0
    %203 = vmatpush1.bf16.msra.mxu0 0
    %204 = vmatprep.subr.bf16.mxu0 0
    %205 = vmatpush1.bf16.msra.mxu0 0
    %206 = vmatprep.subr.bf16.mxu0 0
    %207 = vmatpush1.bf16.msra.mxu0 0
    %208 = vmatprep.subr.bf16.mxu0 0
    %209 = vmatpush1.bf16.msra.mxu0 0
    %210 = vmatprep.subr.bf16.mxu0 0
    %211 = vmatpush1.bf16.msra.mxu0 0
    %212 = vmatprep.subr.bf16.mxu0 0
    %213 = vmatpush1.bf16.msra.mxu0 0
    %214 = vmatprep.subr.bf16.mxu0 0
    %215 = vmatpush1.bf16.msra.mxu0 0
    %216 = vmatprep.mubr.bf16.mxu0 0
    %217 = vmatmul.mubr.bf16.gmra.mrb[0].mxu0 %v112
    %v218 = vpop.f32.mrb[0].mxu0
    %v219 = vadd.f32 %v134, %v218
    %v220 = vpop.f32.mrb[0].mxu0
    %v221 = vpop.f32.mrb[0].mxu0
    %v222 = vpop.f32.mrb[0].mxu0
    %223 = vdwg.mxu0
    %vm224 = vcmp.gt.f32.partialorder %v219, 0.0
    %v225 = vmul.f32 %v219, 0.01
    %v226 = vsel %vm224, %v219, %v225
    %v227 = vpack.c.bf16 %v226, %v226
    %v228 = vld [vmem:[%s5] sm:$0xf]
    %v229 = vld [vmem:[%s5 + $0x4] sm:$0xf]
    %v230 = vld [vmem:[%s5 + $0x8] sm:$0xf]
    %v231 = vld [vmem:[%s5 + $0xc] sm:$0xf]
    %v232 = vld [vmem:[%s5 + $0x10] sm:$0xf]
    %v233 = vld [vmem:[%s5 + $0x14] sm:$0xf]
    %v234 = vld [vmem:[%s5 + $0x18] sm:$0xf]
    %v235 = vld [vmem:[%s5 + $0x1c] sm:$0xf]
    %v236 = vld [vmem:[%s6] sm:$0x1]
    %v238 = vlaneseq
    %v239 = vshrl.u32 %v238, 7
    %v240 = vsub.s32 0, %v239
    %v241 = vrot.slane %v236, %v240
    %v251 = vunpack.c.l.b16 %v228
    %v252 = vunpack.c.l.b16 %v229
    %v253 = vunpack.c.l.b16 %v230
    %v254 = vunpack.c.l.b16 %v231
    %v255 = vunpack.c.l.b16 %v232
    %v256 = vunpack.c.l.b16 %v233
    %v257 = vunpack.c.l.b16 %v234
    %v258 = vunpack.c.l.b16 %v235
    %v259 = vpack.c.b16 %v252, %v251
    %v260 = vpack.c.b16 %v254, %v253
    %v261 = vpack.c.b16 %v256, %v255
    %v262 = vpack.c.b16 %v258, %v257
    %vm267 = vcmask 523264
    %v269 = vsel %vm267, %v227, 0
    %271 = vmatprep.subr.bf16.mxu0 0
    %272 = vmatpush1.bf16.msra.mxu0 %v259
    %273 = vmatprep.subr.bf16.mxu0 0
    %274 = vmatpush1.bf16.msra.mxu0 %v260
    %275 = vmatprep.subr.bf16.mxu0 0
    %276 = vmatpush1.bf16.msra.mxu0 %v261
    %277 = vmatprep.subr.bf16.mxu0 0
    %278 = vmatpush1.bf16.msra.mxu0 %v262
    %279 = vmatprep.subr.bf16.mxu0 0
    %280 = vmatpush1.bf16.msra.mxu0 0
    %281 = vmatprep.subr.bf16.mxu0 0
    %282 = vmatpush1.bf16.msra.mxu0 0
    %283 = vmatprep.subr.bf16.mxu0 0
    %284 = vmatpush1.bf16.msra.mxu0 0
    %285 = vmatprep.subr.bf16.mxu0 0
    %286 = vmatpush1.bf16.msra.mxu0 0
    %287 = vmatprep.subr.bf16.mxu0 0
    %288 = vmatpush1.bf16.msra.mxu0 0
    %289 = vmatprep.subr.bf16.mxu0 0
    %290 = vmatpush1.bf16.msra.mxu0 0
    %291 = vmatprep.subr.bf16.mxu0 0
    %292 = vmatpush1.bf16.msra.mxu0 0
    %293 = vmatprep.subr.bf16.mxu0 0
    %294 = vmatpush1.bf16.msra.mxu0 0
    %295 = vmatprep.subr.bf16.mxu0 0
    %296 = vmatpush1.bf16.msra.mxu0 0
    %297 = vmatprep.subr.bf16.mxu0 0
    %298 = vmatpush1.bf16.msra.mxu0 0
    %299 = vmatprep.subr.bf16.mxu0 0
    %300 = vmatpush1.bf16.msra.mxu0 0
    %301 = vmatprep.subr.bf16.mxu0 0
    %302 = vmatpush1.bf16.msra.mxu0 0
    %303 = vmatprep.mubr.bf16.mxu0 0
    %304 = vmatmul.mubr.bf16.gmra.mrb[0].mxu0 %v269
    %v305 = vpop.f32.mrb[0].mxu0
    %v306 = vadd.f32 %v241, %v305
    %v307 = vpop.f32.mrb[0].mxu0
    %v308 = vpop.f32.mrb[0].mxu0
    %v309 = vpop.f32.mrb[0].mxu0
    %310 = vdwg.mxu0
    %vm311 = vcmp.gt.f32.partialorder %v306, 0.0
    %v312 = vmul.f32 %v306, 0.01
    %v313 = vsel %vm311, %v306, %v312
    %v314 = vpack.c.bf16 %v313, %v313
    %v315 = vld [vmem:[%s7] sm:$0xf]
    %v316 = vld [vmem:[%s7 + $0x4] sm:$0xf]
    %v317 = vld [vmem:[%s7 + $0x8] sm:$0xf]
    %v318 = vld [vmem:[%s7 + $0xc] sm:$0xf]
    %v319 = vld [vmem:[%s8] sm:$0x1]
    %v321 = vlaneseq
    %v322 = vshrl.u32 %v321, 7
    %v323 = vsub.s32 0, %v322
    %v324 = vrot.slane %v319, %v323
    %v330 = vunpack.c.l.b16 %v315
    %v331 = vunpack.c.l.b16 %v316
    %v332 = vunpack.c.l.b16 %v317
    %v333 = vunpack.c.l.b16 %v318
    %v334 = vpack.c.b16 %v331, %v330
    %v335 = vpack.c.b16 %v333, %v332
    %v339 = vsel %vm65, %v314, 0
    %341 = vmatprep.subr.bf16.mxu0 0
    %342 = vmatpush1.bf16.msra.mxu0 %v334
    %343 = vmatprep.subr.bf16.mxu0 0
    %344 = vmatpush1.bf16.msra.mxu0 %v335
    %345 = vmatprep.subr.bf16.mxu0 0
    %346 = vmatpush1.bf16.msra.mxu0 0
    %347 = vmatprep.subr.bf16.mxu0 0
    %348 = vmatpush1.bf16.msra.mxu0 0
    %349 = vmatprep.subr.bf16.mxu0 0
    %350 = vmatpush1.bf16.msra.mxu0 0
    %351 = vmatprep.subr.bf16.mxu0 0
    %352 = vmatpush1.bf16.msra.mxu0 0
    %353 = vmatprep.subr.bf16.mxu0 0
    %354 = vmatpush1.bf16.msra.mxu0 0
    %355 = vmatprep.subr.bf16.mxu0 0
    %356 = vmatpush1.bf16.msra.mxu0 0
    %357 = vmatprep.subr.bf16.mxu0 0
    %358 = vmatpush1.bf16.msra.mxu0 0
    %359 = vmatprep.subr.bf16.mxu0 0
    %360 = vmatpush1.bf16.msra.mxu0 0
    %361 = vmatprep.subr.bf16.mxu0 0
    %362 = vmatpush1.bf16.msra.mxu0 0
    %363 = vmatprep.subr.bf16.mxu0 0
    %364 = vmatpush1.bf16.msra.mxu0 0
    %365 = vmatprep.subr.bf16.mxu0 0
    %366 = vmatpush1.bf16.msra.mxu0 0
    %367 = vmatprep.subr.bf16.mxu0 0
    %368 = vmatpush1.bf16.msra.mxu0 0
    %369 = vmatprep.subr.bf16.mxu0 0
    %370 = vmatpush1.bf16.msra.mxu0 0
    %371 = vmatprep.subr.bf16.mxu0 0
    %372 = vmatpush1.bf16.msra.mxu0 0
    %373 = vmatprep.mubr.bf16.mxu0 0
    %374 = vmatmul.mubr.bf16.gmra.mrb[0].mxu0 %v339
    %v375 = vpop.f32.mrb[0].mxu0
    %v376 = vadd.f32 %v324, %v375
    %v377 = vpop.f32.mrb[0].mxu0
    %v378 = vpop.f32.mrb[0].mxu0
    %v379 = vpop.f32.mrb[0].mxu0
    %380 = vdwg.mxu0
    %vm381 = vcmp.gt.f32.partialorder %v376, 0.0
    %v382 = vmul.f32 %v376, 0.01
    %v383 = vsel %vm381, %v376, %v382
    %v384 = vpack.c.bf16 %v383, %v383
    %v385 = vld [vmem:[%s9] sm:$0xf]
    %v386 = vld [vmem:[%s9 + $0x4] sm:$0xf]
    %v387 = vld [vmem:[%s9 + $0x8] sm:$0xf]
    %v388 = vld [vmem:[%s9 + $0xc] sm:$0xf]
    %v389 = vld [vmem:[%s10] sm:$0x1]
    %v391 = vlaneseq
    %v392 = vshrl.u32 %v391, 7
    %v393 = vsub.s32 0, %v392
    %v394 = vrot.slane %v389, %v393
    %v400 = vunpack.c.l.b16 %v385
    %v401 = vunpack.c.l.b16 %v386
    %v402 = vunpack.c.l.b16 %v387
    %v403 = vunpack.c.l.b16 %v388
    %v404 = vpack.c.b16 %v401, %v400
    %v405 = vpack.c.b16 %v403, %v402
    %v409 = vsel %vm65, %v384, 0
    %411 = vmatprep.subr.bf16.mxu0 0
    %412 = vmatpush1.bf16.msra.mxu0 %v404
    %413 = vmatprep.subr.bf16.mxu0 0
    %414 = vmatpush1.bf16.msra.mxu0 %v405
    %415 = vmatprep.subr.bf16.mxu0 0
    %416 = vmatpush1.bf16.msra.mxu0 0
    %417 = vmatprep.subr.bf16.mxu0 0
    %418 = vmatpush1.bf16.msra.mxu0 0
    %419 = vmatprep.subr.bf16.mxu0 0
    %420 = vmatpush1.bf16.msra.mxu0 0
    %421 = vmatprep.subr.bf16.mxu0 0
    %422 = vmatpush1.bf16.msra.mxu0 0
    %423 = vmatprep.subr.bf16.mxu0 0
    %424 = vmatpush1.bf16.msra.mxu0 0
    %425 = vmatprep.subr.bf16.mxu0 0
    %426 = vmatpush1.bf16.msra.mxu0 0
    %427 = vmatprep.subr.bf16.mxu0 0
    %428 = vmatpush1.bf16.msra.mxu0 0
    %429 = vmatprep.subr.bf16.mxu0 0
    %430 = vmatpush1.bf16.msra.mxu0 0
    %431 = vmatprep.subr.bf16.mxu0 0
    %432 = vmatpush1.bf16.msra.mxu0 0
    %433 = vmatprep.subr.bf16.mxu0 0
    %434 = vmatpush1.bf16.msra.mxu0 0
    %435 = vmatprep.subr.bf16.mxu0 0
    %436 = vmatpush1.bf16.msra.mxu0 0
    %437 = vmatprep.subr.bf16.mxu0 0
    %438 = vmatpush1.bf16.msra.mxu0 0
    %439 = vmatprep.subr.bf16.mxu0 0
    %440 = vmatpush1.bf16.msra.mxu0 0
    %441 = vmatprep.subr.bf16.mxu0 0
    %442 = vmatpush1.bf16.msra.mxu0 0
    %443 = vmatprep.mubr.bf16.mxu0 0
    %444 = vmatmul.mubr.bf16.gmra.mrb[0].mxu0 %v409
    %v445 = vpop.f32.mrb[0].mxu0
    %v446 = vadd.f32 %v394, %v445
    %v447 = vpop.f32.mrb[0].mxu0
    %v448 = vpop.f32.mrb[0].mxu0
    %v449 = vpop.f32.mrb[0].mxu0
    %450 = vdwg.mxu0
    %vm451 = vcmask 130048
    %452 = vst.msk [vmem:[#allocation2] sm:$0xff] %vm451, %v446
    // Predicated region
    $region46: #{tpu_custom_call.1} parent=1 // pred_check
      _
    $region47: #{tpu_custom_call.1} parent=1 // pred_check_branch
      %454 = sbr.rel (0) target = $region49
    $region48: #{tpu_custom_call.1} parent=1 // pred_region
      %s456 = ssub.s32 128, 128
      %457 = vsyncadd [#allocation3], %s456
      %s459 = sshll.u32 [#allocation2], 4
      %s460 = int_to_ptr.vmem [resolvable:$true] %s459
      %462 = dma.vmem_to_hbm [thread:$0]  %s460, 128, %s11, [#allocation3]
    $region49: #{tpu_custom_call.1} parent=1 // pred_fallthru
      _
    // Predicated region
    $region50: #{tpu_custom_call.1} parent=1 // pred_check
      _
    $region51: #{tpu_custom_call.1} parent=1 // pred_check_branch
      %464 = sbr.rel (0) target = $region53
    $region52: #{tpu_custom_call.1} parent=1 // pred_region
      %465 = dma.done [#allocation3], 128
    $region53: #{tpu_custom_call.1} parent=1 // pred_fallthru
      _
    %466 = vsyncpa [#allocation3], 1

</llo_original>
